<compile_context>
chip_gen: v5e
topology: v5e:2x2
jax: 0.10.0
libtpu: 0.0.40
codegen_flags: <defaults>
</compile_context>

<pallas_src>
import functools

import jax
import jax.numpy as jnp
from jax.experimental import pallas as pl
from jax.experimental.pallas import tpu as pltpu

NEG_SLOPE = 0.2


def _leaky(x):
    # Identical to LeakyReLU(0.2) for slope < 1; one mul + one max on the VPU.
    return jnp.maximum(x, NEG_SLOPE * x)


def gcn_kernel(depth,
               x_ref, adj_ref,
               wh_ref, bh_ref,
               w1_ref, b1_ref, w2_ref, b2_ref,
               wt_ref, bt_ref,
               out_ref):
    """One grid step = one batch element.

    x_ref   : (Cin_pad, N) bf16
    adj_ref : (N, N)       bf16  (column-normalized adjacency, shared)
    w*_ref  : bf16 conv weights with BatchNorm scale folded in (replicated)
    b*_ref  : f32 per-channel shifts/biases, shape (C, 1) / (depth, C, 1);
              broadcast across lanes by the in-kernel add
    out_ref : (Cout, N)    f32
    """
    x = x_ref[...]
    adj = adj_ref[...]

    # head: BN-folded 1x1 conv (bias-free) -> shift -> LeakyReLU(0.2)
    h = jnp.dot(wh_ref[...], x, preferred_element_type=jnp.float32)
    h = _leaky(h + bh_ref[...])
    shortcut = h
    hb = h.astype(jnp.bfloat16)

    # graph blocks: (BN-folded conv1 + bias) -> LeakyReLU -> conv2 -> @ adj
    for d in range(depth):  # depth is small; static unroll is fine here
        y = jnp.dot(w1_ref[d], hb, preferred_element_type=jnp.float32)
        y = _leaky(y + b1_ref[d]).astype(jnp.bfloat16)
        y = jnp.dot(w2_ref[d], y, preferred_element_type=jnp.float32)
        y = (y + b2_ref[d]).astype(jnp.bfloat16)
        hb = jnp.dot(y, adj,
                     preferred_element_type=jnp.float32).astype(jnp.bfloat16)

    # tail: BN-folded 1x1 conv -> shift -> LeakyReLU, then residual add
    t = jnp.dot(wt_ref[...], hb, preferred_element_type=jnp.float32)
    t = _leaky(t + bt_ref[...])
    out_ref[...] = (t + shortcut).astype(out_ref.dtype)


def prepare_params(p, depth, cin):
    """One-time parameter prep (BN folding, bf16 casts, Cin padding).

    Hoisted out of the per-call path: call once, reuse the returned dict.
    """
    f32, bf16 = jnp.float32, jnp.bfloat16
    cout = p["w_head"].shape[0]
    dim = p["w1"].shape[1]
    cin_pad = max(16, -(-cin // 16) * 16)  # bf16 min tile is (16, 128)

    wh = p["head_scale"] * p["w_head"]                          # (Cout, Cin)
    wh = jnp.pad(wh, ((0, 0), (0, cin_pad - cin))).astype(bf16)
    bh = p["head_shift"].reshape(cout, 1).astype(f32)

    w1 = (p["g_scale"] * p["w1"]).astype(bf16)                  # (D, dim, dim)
    b1 = (p["g_scale"] * p["b1"] + p["g_shift"]).reshape(depth, dim, 1).astype(f32)
    w2 = p["w2"].astype(bf16)
    b2 = p["b2"].reshape(depth, dim, 1).astype(f32)

    wt = (p["tail_scale"] * p["w_tail"]).astype(bf16)           # (Cout, Cout)
    bt = p["tail_shift"].reshape(cout, 1).astype(f32)

    return dict(wh=wh, bh=bh, w1=w1, b1=b1, w2=w2, b2=b2, wt=wt, bt=bt)


def gcn_forward(x, adj_bf16, prep, depth):
    B, Cin, N = x.shape
    cin_pad = prep["wh"].shape[1]
    Cout = prep["wh"].shape[0]

    # Per-call input prep: pad Cin to the bf16 sublane tile and cast.
    xp = jnp.pad(x, ((0, 0), (0, cin_pad - Cin), (0, 0))).astype(jnp.bfloat16)

    def rep_spec(a):  # replicated (same block every grid step)
        n = a.ndim
        return pl.BlockSpec(a.shape, lambda b, _n=n: (0,) * _n)

    wh, bh, w1, b1, w2, b2, wt, bt = (
        prep[k] for k in ("wh", "bh", "w1", "b1", "w2", "b2", "wt", "bt"))

    out = pl.pallas_call(
        functools.partial(gcn_kernel, depth),
        out_shape=jax.ShapeDtypeStruct((B, Cout, N), jnp.float32),
        grid_spec=pltpu.PrefetchScalarGridSpec(
            num_scalar_prefetch=0,
            grid=(B,),  # one batch element per grid step (v7x: 2 TCs split it)
            in_specs=[pl.BlockSpec((None, cin_pad, N), lambda b: (b, 0, 0)),
                      rep_spec(adj_bf16),
                      rep_spec(wh), rep_spec(bh),
                      rep_spec(w1), rep_spec(b1),
                      rep_spec(w2), rep_spec(b2),
                      rep_spec(wt), rep_spec(bt)],
            out_specs=pl.BlockSpec((None, Cout, N), lambda b: (b, 0, 0)),
        ),
        compiler_params=pltpu.CompilerParams(
            dimension_semantics=("parallel",),
            vmem_limit_bytes=32 * 1024 * 1024),  # footprint << 1 MiB; safe on v5e/v6e/v7x
    )(xp, adj_bf16, wh, bh, w1, b1, w2, b2, wt, bt)

    return out


# ---------------- plain-JAX reference (for correctness check) ----------------
def gcn_ref(x, adj, p, depth):
    def lk(v):
        return jnp.where(v > 0, v, NEG_SLOPE * v)
    h = jnp.einsum("oc,bcn->bon", p["w_head"], x)
    h = h * p["head_scale"][None] + p["head_shift"][None]
    h = lk(h)
    sc = h
    for d in range(depth):
        y = jnp.einsum("oc,bcn->bon", p["w1"][d], h) + p["b1"][d][None]
        y = y * p["g_scale"][d][None] + p["g_shift"][d][None]
        y = lk(y)
        y = jnp.einsum("oc,bcn->bon", p["w2"][d], y) + p["b2"][d][None]
        h = jnp.einsum("bon,nm->bom", y, adj)
    t = jnp.einsum("oc,bcn->bon", p["w_tail"], h)
    t = t * p["tail_scale"][None] + p["tail_shift"][None]
    t = lk(t)
    return t + sc


# ---------------- deterministic parameter construction ----------------
def fold_bn(gamma, beta, mean, var, eps=1e-5):
    scale = gamma / jnp.sqrt(var + eps)
    shift = beta - mean * scale
    return scale[:, None], shift[:, None]


def make_params(key, cin, cout, dim, depth):
    assert dim == cout, "graph layers operate on the head's output channels"
    ks = jax.random.split(key, 16)
    f32 = jnp.float32

    w_head = 0.2 * jax.random.normal(ks[0], (cout, cin), f32)
    hs, hb = fold_bn(1.0 + 0.1 * jax.random.normal(ks[1], (cout,), f32),
                     0.1 * jax.random.normal(ks[2], (cout,), f32),
                     0.1 * jax.random.normal(ks[3], (cout,), f32),
                     0.5 + jnp.abs(jax.random.normal(ks[4], (cout,), f32)))

    w1 = 0.2 * jax.random.normal(ks[5], (depth, dim, dim), f32)
    b1 = 0.1 * jax.random.normal(ks[6], (depth, dim, 1), f32)
    g_gamma = 1.0 + 0.1 * jax.random.normal(ks[7], (depth, dim), f32)
    g_beta = 0.1 * jax.random.normal(ks[8], (depth, dim), f32)
    g_mean = 0.1 * jax.random.normal(ks[9], (depth, dim), f32)
    g_var = 0.5 + jnp.abs(jax.random.normal(ks[10], (depth, dim), f32))
    g_scale = (g_gamma / jnp.sqrt(g_var + 1e-5))[..., None]
    g_shift = (g_beta - g_mean * g_gamma / jnp.sqrt(g_var + 1e-5))[..., None]
    w2 = 0.2 * jax.random.normal(ks[11], (depth, dim, dim), f32)
    b2 = 0.1 * jax.random.normal(ks[12], (depth, dim, 1), f32)

    w_tail = 0.2 * jax.random.normal(ks[13], (cout, cout), f32)
    ts, tb = fold_bn(1.0 + 0.1 * jax.random.normal(ks[14], (cout,), f32),
                     0.1 * jax.random.normal(ks[15], (cout,), f32),
                     jnp.zeros((cout,), f32),
                     jnp.ones((cout,), f32))

    return dict(w_head=w_head, head_scale=hs, head_shift=hb,
                w1=w1, b1=b1, g_scale=g_scale, g_shift=g_shift, w2=w2, b2=b2,
                w_tail=w_tail, tail_scale=ts, tail_shift=tb)


if __name__ == "__main__":
    # kernel_size=1 variant of `graph`; dim == outchannel (required by forward)
    B, C_IN, C_OUT, DIM, N, DEPTH = 2, 4, 32, 32, 128, 2
    # TODO(synk): kernel_size=3/5 variants of `graph` (padded Conv1d) are not
    # implemented here; only the kernel_size=1 (pure 1x1 conv) path is.

    key = jax.random.PRNGKey(0)
    kx, kadj, kp = jax.random.split(key, 3)
    x = jax.random.normal(kx, (B, C_IN, N), jnp.float32)
    # column-normalized adjacency, shared across the batch (as in the module)
    adj_raw = jnp.abs(jax.random.normal(kadj, (N, N), jnp.float32))
    adj = adj_raw / jnp.sum(adj_raw, axis=0, keepdims=True)

    params = make_params(kp, C_IN, C_OUT, DIM, DEPTH)

    # One-time prep (hoisted out of the per-call path).
    prep = prepare_params(params, DEPTH, C_IN)
    adj_bf16 = adj.astype(jnp.bfloat16)

    fwd = jax.jit(functools.partial(gcn_forward, depth=DEPTH))
    out = jax.block_until_ready(fwd(x, adj_bf16, prep))

    ref = gcn_ref(x, adj, params, DEPTH)
    assert out.shape == (B, C_OUT, N)
    # bf16 matmul operands (incl. bf16 adjacency) with f32 accumulation.
    assert jnp.allclose(out, ref, rtol=5e-2, atol=5e-2), (
        float(jnp.max(jnp.abs(out - ref))))

    print("KERNEL_OK")
</pallas_src>

<mosaic_0001>
module attributes {stable_mosaic.version = 11 : i64} {
  func.func @gcn_kernel(%arg0: i32, %arg1: memref<1x16x128xbf16, #tpu.memory_space<vmem>>, %arg2: memref<128x128xbf16, #tpu.memory_space<vmem>>, %arg3: memref<32x16xbf16, #tpu.memory_space<vmem>>, %arg4: memref<32x1xf32, #tpu.memory_space<vmem>>, %arg5: memref<2x32x32xbf16, #tpu.memory_space<vmem>>, %arg6: memref<2x32x1xf32, #tpu.memory_space<vmem>>, %arg7: memref<2x32x32xbf16, #tpu.memory_space<vmem>>, %arg8: memref<2x32x1xf32, #tpu.memory_space<vmem>>, %arg9: memref<32x32xbf16, #tpu.memory_space<vmem>>, %arg10: memref<32x1xf32, #tpu.memory_space<vmem>>, %arg11: memref<1x32x128xf32, #tpu.memory_space<vmem>>) attributes {dimension_semantics = [#tpu.dimension_semantics<parallel>], iteration_bounds = array<i64: 2>, scalar_prefetch = 0 : i64, scratch_operands = 0 : i64, tpu.core_type = #tpu.core_type<tc>, window_params = [{transform_indices = @transform_0, window_bounds = array<i64: 1, 16, 128>}, {pipeline_mode = #tpu.pipeline_mode<synchronous>, transform_indices = @transform_1, window_bounds = array<i64: 128, 128>}, {pipeline_mode = #tpu.pipeline_mode<synchronous>, transform_indices = @transform_2, window_bounds = array<i64: 32, 16>}, {pipeline_mode = #tpu.pipeline_mode<synchronous>, transform_indices = @transform_3, window_bounds = array<i64: 32, 1>}, {pipeline_mode = #tpu.pipeline_mode<synchronous>, transform_indices = @transform_4, window_bounds = array<i64: 2, 32, 32>}, {pipeline_mode = #tpu.pipeline_mode<synchronous>, transform_indices = @transform_5, window_bounds = array<i64: 2, 32, 1>}, {pipeline_mode = #tpu.pipeline_mode<synchronous>, transform_indices = @transform_6, window_bounds = array<i64: 2, 32, 32>}, {pipeline_mode = #tpu.pipeline_mode<synchronous>, transform_indices = @transform_7, window_bounds = array<i64: 2, 32, 1>}, {pipeline_mode = #tpu.pipeline_mode<synchronous>, transform_indices = @transform_8, window_bounds = array<i64: 32, 32>}, {pipeline_mode = #tpu.pipeline_mode<synchronous>, transform_indices = @transform_9, window_bounds = array<i64: 32, 1>}, {transform_indices = @transform_10, window_bounds = array<i64: 1, 32, 128>}]} {
    %c0 = arith.constant 0 : index
    %c0_0 = arith.constant 0 : index
    %c0_1 = arith.constant 0 : index
    %0 = vector.load %arg1[%c0, %c0_0, %c0_1] : memref<1x16x128xbf16, #tpu.memory_space<vmem>>, vector<1x16x128xbf16>
    %1 = vector.shape_cast %0 : vector<1x16x128xbf16> to vector<16x128xbf16>
    %c0_2 = arith.constant 0 : index
    %c0_3 = arith.constant 0 : index
    %2 = vector.load %arg2[%c0_2, %c0_3] : memref<128x128xbf16, #tpu.memory_space<vmem>>, vector<128x128xbf16>
    %c0_4 = arith.constant 0 : index
    %c0_5 = arith.constant 0 : index
    %3 = vector.load %arg3[%c0_4, %c0_5] : memref<32x16xbf16, #tpu.memory_space<vmem>>, vector<32x16xbf16>
    %cst = arith.constant dense<0.000000e+00> : vector<32x128xf32>
    %4 = tpu.matmul %3, %1, %cst {dimension_numbers = #tpu.dot_dimension_numbers<[1], [0], [0], [1], [0, 0, 1, 1], [], []>} : vector<32x16xbf16>, vector<16x128xbf16>, vector<32x128xf32> -> vector<32x128xf32>
    %c0_6 = arith.constant 0 : index
    %c0_7 = arith.constant 0 : index
    %5 = vector.load %arg4[%c0_6, %c0_7] : memref<32x1xf32, #tpu.memory_space<vmem>>, vector<32x1xf32>
    %6 = vector.broadcast %5 : vector<32x1xf32> to vector<32x128xf32>
    %7 = arith.addf %4, %6 : vector<32x128xf32>
    %cst_8 = arith.constant 2.000000e-01 : f32
    %8 = vector.broadcast %cst_8 : f32 to vector<32x128xf32>
    %9 = arith.mulf %8, %7 : vector<32x128xf32>
    %10 = arith.maximumf %7, %9 : vector<32x128xf32>
    %11 = arith.truncf %10 : vector<32x128xf32> to vector<32x128xbf16>
    %c0_9 = arith.constant 0 : index
    %c0_10 = arith.constant 0 : index
    %c0_11 = arith.constant 0 : index
    %12 = vector.load %arg5[%c0_9, %c0_10, %c0_11] : memref<2x32x32xbf16, #tpu.memory_space<vmem>>, vector<1x32x32xbf16>
    %13 = vector.shape_cast %12 : vector<1x32x32xbf16> to vector<32x32xbf16>
    %cst_12 = arith.constant dense<0.000000e+00> : vector<32x128xf32>
    %14 = tpu.matmul %13, %11, %cst_12 {dimension_numbers = #tpu.dot_dimension_numbers<[1], [0], [0], [1], [0, 0, 1, 1], [], []>} : vector<32x32xbf16>, vector<32x128xbf16>, vector<32x128xf32> -> vector<32x128xf32>
    %c0_13 = arith.constant 0 : index
    %c0_14 = arith.constant 0 : index
    %c0_15 = arith.constant 0 : index
    %15 = vector.load %arg6[%c0_13, %c0_14, %c0_15] : memref<2x32x1xf32, #tpu.memory_space<vmem>>, vector<1x32x1xf32>
    %16 = vector.shape_cast %15 : vector<1x32x1xf32> to vector<32x1xf32>
    %17 = vector.broadcast %16 : vector<32x1xf32> to vector<32x128xf32>
    %18 = arith.addf %14, %17 : vector<32x128xf32>
    %cst_16 = arith.constant 2.000000e-01 : f32
    %19 = vector.broadcast %cst_16 : f32 to vector<32x128xf32>
    %20 = arith.mulf %19, %18 : vector<32x128xf32>
    %21 = arith.maximumf %18, %20 : vector<32x128xf32>
    %22 = arith.truncf %21 : vector<32x128xf32> to vector<32x128xbf16>
    %c0_17 = arith.constant 0 : index
    %c0_18 = arith.constant 0 : index
    %c0_19 = arith.constant 0 : index
    %23 = vector.load %arg7[%c0_17, %c0_18, %c0_19] : memref<2x32x32xbf16, #tpu.memory_space<vmem>>, vector<1x32x32xbf16>
    %24 = vector.shape_cast %23 : vector<1x32x32xbf16> to vector<32x32xbf16>
    %cst_20 = arith.constant dense<0.000000e+00> : vector<32x128xf32>
    %25 = tpu.matmul %24, %22, %cst_20 {dimension_numbers = #tpu.dot_dimension_numbers<[1], [0], [0], [1], [0, 0, 1, 1], [], []>} : vector<32x32xbf16>, vector<32x128xbf16>, vector<32x128xf32> -> vector<32x128xf32>
    %c0_21 = arith.constant 0 : index
    %c0_22 = arith.constant 0 : index
    %c0_23 = arith.constant 0 : index
    %26 = vector.load %arg8[%c0_21, %c0_22, %c0_23] : memref<2x32x1xf32, #tpu.memory_space<vmem>>, vector<1x32x1xf32>
    %27 = vector.shape_cast %26 : vector<1x32x1xf32> to vector<32x1xf32>
    %28 = vector.broadcast %27 : vector<32x1xf32> to vector<32x128xf32>
    %29 = arith.addf %25, %28 : vector<32x128xf32>
    %30 = arith.truncf %29 : vector<32x128xf32> to vector<32x128xbf16>
    %cst_24 = arith.constant dense<0.000000e+00> : vector<32x128xf32>
    %31 = tpu.matmul %30, %2, %cst_24 {dimension_numbers = #tpu.dot_dimension_numbers<[1], [0], [0], [1], [0, 0, 1, 1], [], []>} : vector<32x128xbf16>, vector<128x128xbf16>, vector<32x128xf32> -> vector<32x128xf32>
    %32 = arith.truncf %31 : vector<32x128xf32> to vector<32x128xbf16>
    %c1 = arith.constant 1 : index
    %c0_25 = arith.constant 0 : index
    %c0_26 = arith.constant 0 : index
    %33 = vector.load %arg5[%c1, %c0_25, %c0_26] : memref<2x32x32xbf16, #tpu.memory_space<vmem>>, vector<1x32x32xbf16>
    %34 = vector.shape_cast %33 : vector<1x32x32xbf16> to vector<32x32xbf16>
    %cst_27 = arith.constant dense<0.000000e+00> : vector<32x128xf32>
    %35 = tpu.matmul %34, %32, %cst_27 {dimension_numbers = #tpu.dot_dimension_numbers<[1], [0], [0], [1], [0, 0, 1, 1], [], []>} : vector<32x32xbf16>, vector<32x128xbf16>, vector<32x128xf32> -> vector<32x128xf32>
    %c1_28 = arith.constant 1 : index
    %c0_29 = arith.constant 0 : index
    %c0_30 = arith.constant 0 : index
    %36 = vector.load %arg6[%c1_28, %c0_29, %c0_30] : memref<2x32x1xf32, #tpu.memory_space<vmem>>, vector<1x32x1xf32>
    %37 = vector.shape_cast %36 : vector<1x32x1xf32> to vector<32x1xf32>
    %38 = vector.broadcast %37 : vector<32x1xf32> to vector<32x128xf32>
    %39 = arith.addf %35, %38 : vector<32x128xf32>
    %cst_31 = arith.constant 2.000000e-01 : f32
    %40 = vector.broadcast %cst_31 : f32 to vector<32x128xf32>
    %41 = arith.mulf %40, %39 : vector<32x128xf32>
    %42 = arith.maximumf %39, %41 : vector<32x128xf32>
    %43 = arith.truncf %42 : vector<32x128xf32> to vector<32x128xbf16>
    %c1_32 = arith.constant 1 : index
    %c0_33 = arith.constant 0 : index
    %c0_34 = arith.constant 0 : index
    %44 = vector.load %arg7[%c1_32, %c0_33, %c0_34] : memref<2x32x32xbf16, #tpu.memory_space<vmem>>, vector<1x32x32xbf16>
    %45 = vector.shape_cast %44 : vector<1x32x32xbf16> to vector<32x32xbf16>
    %cst_35 = arith.constant dense<0.000000e+00> : vector<32x128xf32>
    %46 = tpu.matmul %45, %43, %cst_35 {dimension_numbers = #tpu.dot_dimension_numbers<[1], [0], [0], [1], [0, 0, 1, 1], [], []>} : vector<32x32xbf16>, vector<32x128xbf16>, vector<32x128xf32> -> vector<32x128xf32>
    %c1_36 = arith.constant 1 : index
    %c0_37 = arith.constant 0 : index
    %c0_38 = arith.constant 0 : index
    %47 = vector.load %arg8[%c1_36, %c0_37, %c0_38] : memref<2x32x1xf32, #tpu.memory_space<vmem>>, vector<1x32x1xf32>
    %48 = vector.shape_cast %47 : vector<1x32x1xf32> to vector<32x1xf32>
    %49 = vector.broadcast %48 : vector<32x1xf32> to vector<32x128xf32>
    %50 = arith.addf %46, %49 : vector<32x128xf32>
    %51 = arith.truncf %50 : vector<32x128xf32> to vector<32x128xbf16>
    %cst_39 = arith.constant dense<0.000000e+00> : vector<32x128xf32>
    %52 = tpu.matmul %51, %2, %cst_39 {dimension_numbers = #tpu.dot_dimension_numbers<[1], [0], [0], [1], [0, 0, 1, 1], [], []>} : vector<32x128xbf16>, vector<128x128xbf16>, vector<32x128xf32> -> vector<32x128xf32>
    %53 = arith.truncf %52 : vector<32x128xf32> to vector<32x128xbf16>
    %c0_40 = arith.constant 0 : index
    %c0_41 = arith.constant 0 : index
    %54 = vector.load %arg9[%c0_40, %c0_41] : memref<32x32xbf16, #tpu.memory_space<vmem>>, vector<32x32xbf16>
    %cst_42 = arith.constant dense<0.000000e+00> : vector<32x128xf32>
    %55 = tpu.matmul %54, %53, %cst_42 {dimension_numbers = #tpu.dot_dimension_numbers<[1], [0], [0], [1], [0, 0, 1, 1], [], []>} : vector<32x32xbf16>, vector<32x128xbf16>, vector<32x128xf32> -> vector<32x128xf32>
    %c0_43 = arith.constant 0 : index
    %c0_44 = arith.constant 0 : index
    %56 = vector.load %arg10[%c0_43, %c0_44] : memref<32x1xf32, #tpu.memory_space<vmem>>, vector<32x1xf32>
    %57 = vector.broadcast %56 : vector<32x1xf32> to vector<32x128xf32>
    %58 = arith.addf %55, %57 : vector<32x128xf32>
    %cst_45 = arith.constant 2.000000e-01 : f32
    %59 = vector.broadcast %cst_45 : f32 to vector<32x128xf32>
    %60 = arith.mulf %59, %58 : vector<32x128xf32>
    %61 = arith.maximumf %58, %60 : vector<32x128xf32>
    %62 = arith.addf %61, %10 : vector<32x128xf32>
    %c0_46 = arith.constant 0 : index
    %c0_47 = arith.constant 0 : index
    %c0_48 = arith.constant 0 : index
    %63 = vector.load %arg11[%c0_46, %c0_47, %c0_48] : memref<1x32x128xf32, #tpu.memory_space<vmem>>, vector<1x32x128xf32>
    %64 = vector.shape_cast %63 : vector<1x32x128xf32> to vector<32x128xf32>
    %65 = vector.shape_cast %62 : vector<32x128xf32> to vector<1x32x128xf32>
    tpu.vector_store %arg11[%c0_46, %c0_47, %c0_48], %65 {strides = array<i32>} : memref<1x32x128xf32, #tpu.memory_space<vmem>>, vector<1x32x128xf32>,
    return
  }
  func.func @transform_0(%arg0: i32) -> (i32, i32, i32) {
    %c0_i32 = arith.constant 0 : i32
    %c0_i32_0 = arith.constant 0 : i32
    %c0_i32_1 = arith.constant 0 : i32
    return %arg0, %c0_i32, %c0_i32_0 : i32, i32, i32
  }
  func.func @transform_1(%arg0: i32) -> (i32, i32) {
    %c0_i32 = arith.constant 0 : i32
    %c0_i32_0 = arith.constant 0 : i32
    %c0_i32_1 = arith.constant 0 : i32
    return %c0_i32, %c0_i32_0 : i32, i32
  }
  func.func @transform_2(%arg0: i32) -> (i32, i32) {
    %c0_i32 = arith.constant 0 : i32
    %c0_i32_0 = arith.constant 0 : i32
    %c0_i32_1 = arith.constant 0 : i32
    return %c0_i32, %c0_i32_0 : i32, i32
  }
  func.func @transform_3(%arg0: i32) -> (i32, i32) {
    %c0_i32 = arith.constant 0 : i32
    %c0_i32_0 = arith.constant 0 : i32
    %c0_i32_1 = arith.constant 0 : i32
    return %c0_i32, %c0_i32_0 : i32, i32
  }
  func.func @transform_4(%arg0: i32) -> (i32, i32, i32) {
    %c0_i32 = arith.constant 0 : i32
    %c0_i32_0 = arith.constant 0 : i32
    %c0_i32_1 = arith.constant 0 : i32
    %c0_i32_2 = arith.constant 0 : i32
    return %c0_i32, %c0_i32_0, %c0_i32_1 : i32, i32, i32
  }
  func.func @transform_5(%arg0: i32) -> (i32, i32, i32) {
    %c0_i32 = arith.constant 0 : i32
    %c0_i32_0 = arith.constant 0 : i32
    %c0_i32_1 = arith.constant 0 : i32
    %c0_i32_2 = arith.constant 0 : i32
    return %c0_i32, %c0_i32_0, %c0_i32_1 : i32, i32, i32
  }
  func.func @transform_6(%arg0: i32) -> (i32, i32, i32) {
    %c0_i32 = arith.constant 0 : i32
    %c0_i32_0 = arith.constant 0 : i32
    %c0_i32_1 = arith.constant 0 : i32
    %c0_i32_2 = arith.constant 0 : i32
    return %c0_i32, %c0_i32_0, %c0_i32_1 : i32, i32, i32
  }
  func.func @transform_7(%arg0: i32) -> (i32, i32, i32) {
    %c0_i32 = arith.constant 0 : i32
    %c0_i32_0 = arith.constant 0 : i32
    %c0_i32_1 = arith.constant 0 : i32
    %c0_i32_2 = arith.constant 0 : i32
    return %c0_i32, %c0_i32_0, %c0_i32_1 : i32, i32, i32
  }
  func.func @transform_8(%arg0: i32) -> (i32, i32) {
    %c0_i32 = arith.constant 0 : i32
    %c0_i32_0 = arith.constant 0 : i32
    %c0_i32_1 = arith.constant 0 : i32
    return %c0_i32, %c0_i32_0 : i32, i32
  }
  func.func @transform_9(%arg0: i32) -> (i32, i32) {
    %c0_i32 = arith.constant 0 : i32
    %c0_i32_0 = arith.constant 0 : i32
    %c0_i32_1 = arith.constant 0 : i32
    return %c0_i32, %c0_i32_0 : i32, i32
  }
  func.func @transform_10(%arg0: i32) -> (i32, i32, i32) {
    %c0_i32 = arith.constant 0 : i32
    %c0_i32_0 = arith.constant 0 : i32
    %c0_i32_1 = arith.constant 0 : i32
    return %arg0, %c0_i32, %c0_i32_0 : i32, i32, i32
  }
}

</mosaic_0001>

<llo_original>
// kernel: gcn_forward.1
$region0: #{gcn_forward.1}
  #allocation0 [shape = 'u32[]', space=smem, size = 0x4, offset = 0x4, fixed_abs, tag = 'smem constant byte address 0x4 - core index']
  #allocation1 [shape = 'u32[72,128]{1,0:T(1,128)}', space=vmem, size = 0x9000, scoped, tag = 'internal scratch']
  %s0 = inlined_call_operand.vmem [shape: bf16[2,16,128], index: 0, kind: input, shape index: {}]
  %s1 = inlined_call_operand.vmem [shape: bf16[128,128], index: 1, kind: input, shape index: {}]
  %s2 = inlined_call_operand.vmem [shape: bf16[32,16], index: 2, kind: input, shape index: {}]
  %s3 = inlined_call_operand.vmem [shape: f32[32,1], index: 3, kind: input, shape index: {}]
  %s4 = inlined_call_operand.vmem [shape: bf16[2,32,32], index: 4, kind: input, shape index: {}]
  %s5 = inlined_call_operand.vmem [shape: f32[2,32,1], index: 5, kind: input, shape index: {}]
  %s6 = inlined_call_operand.vmem [shape: bf16[2,32,32], index: 6, kind: input, shape index: {}]
  %s7 = inlined_call_operand.vmem [shape: f32[2,32,1], index: 7, kind: input, shape index: {}]
  %s8 = inlined_call_operand.vmem [shape: bf16[32,32], index: 8, kind: input, shape index: {}]
  %s9 = inlined_call_operand.vmem [shape: f32[32,1], index: 9, kind: input, shape index: {}]
  %s10 = inlined_call_operand.hbm [shape: f32[2,32,128], index: 10, kind: output, shape index: {}]
  %s11 = sld [smem:[#allocation0]]
  $region73: #{gcn_forward.1} parent=0
    _
  %s13 = ssub.s32 1, %s11
  %s14 = scalar_select 0, %s13, %s11
  $region1: #{gcn_forward.1} parent=0
    #allocation2 [shape = 'u8[32768]{0}', space=vmem, size = 0x8000, scoped, tag = 'output window, operand 0']
    #allocation3 [shape = 's32[2]{0}', space=sflag, size = 0x8, scoped, tag = 'scoped memory for gcn_forward.1']
    %15 = vsyncpa [#allocation3], 0
    %s16 = scalar_lea.sflag [#allocation3], 1
    %17 = vsyncpa %s16, 0
    loop: start=0, step=1, limit=4
    $region2: #{gcn_forward.1} parent=1 // loop_pre_header
      _
    $region3: #{gcn_forward.1} parent=1 // loop_header
      %s19 = sphi 0, %s23
      %p20 = scmp.ge.s32.totalorder %s19, 4
      %s29 = sphi 0, %s31
      %s32 = sphi 0, %s29
      %s33 = sphi 0, %s32
      %s49 = sphi 0, %s33
      %s53 = sphi 0, %s53
      %s55 = sphi 0, %s53
      %s56 = sphi 0, %s55
      %s70 = sphi 0, %s56
      %s74 = sphi 0, %s74
      %s76 = sphi 0, %s74
      %s77 = sphi 0, %s76
      %s91 = sphi 0, %s77
      %s95 = sphi 0, %s95
      %s97 = sphi 0, %s95
      %s98 = sphi 0, %s97
      %s112 = sphi 0, %s98
      %s116 = sphi 0, %s116
      %s118 = sphi 0, %s116
      %s119 = sphi 0, %s118
      %s133 = sphi 0, %s119
      %s137 = sphi 0, %s137
      %s139 = sphi 0, %s137
      %s140 = sphi 0, %s139
      %s154 = sphi 0, %s140
      %s158 = sphi 0, %s158
      %s160 = sphi 0, %s158
      %s161 = sphi 0, %s160
      %s175 = sphi 0, %s161
      %s179 = sphi 0, %s179
      %s181 = sphi 0, %s179
      %s182 = sphi 0, %s181
      %s196 = sphi 0, %s182
      %s200 = sphi 0, %s200
      %s202 = sphi 0, %s200
      %s203 = sphi 0, %s202
      %s217 = sphi 0, %s203
      %s221 = sphi 0, %s221
      %s223 = sphi 0, %s221
      %s224 = sphi 0, %s223
      %s238 = sphi 0, %s224
      %s244 = sphi 0, %s246
      %s247 = sphi 0, %s244
      %s248 = sphi 0, %s247
      %s264 = sphi 0, %s248
    $region4: #{gcn_forward.1} parent=1 // loop_header_branch
      %22 = sbr.rel (%p20) target = $region8
    $region5: #{gcn_forward.1} parent=1 // loop_body
      %s24 = ssub.s32 %s19, 1
      %s25 = ssub.s32 %s19, 2
      %s26 = sadd.s32 %s19, 1
      %s27 = ssub.s32 %s19, %s26
      %p28 = scmp.eq.s32.totalorder %s27, 0
      %s30 = sadd.s32 %s29, 1
      %s31 = scalar_select %p28, %s29, %s30
      %p34 = pneg %p28
      %p35 = scmp.eq.s32.totalorder %s19, 1
      %p36 = por %p34, %p35
      %p37 = scmp.ne.s32.totalorder %s29, %s32
      %p38 = scmp.eq.s32.totalorder %s19, 0
      %p39 = por %p37, %p38
      %p40 = scmp.ne.s32.totalorder %s29, %s32
      %p41 = scmp.eq.s32.totalorder %s24, 1
      %p42 = por %p40, %p41
      %p43 = scmp.ne.s32.totalorder %s32, %s33
      %p44 = scmp.eq.s32.totalorder %s24, 0
      %p45 = por %p43, %p44
      %p46 = scmp.ne.s32.totalorder %s32, %s33
      %p47 = scmp.eq.s32.totalorder %s25, 1
      %p48 = por %p46, %p47
      %p50 = scmp.ne.s32.totalorder %s33, %s49
      %p51 = scmp.eq.s32.totalorder %s25, 0
      %p52 = por %p50, %p51
      %s54 = sadd.s32 %s53, 1
      %p57 = scmp.eq.s32.totalorder %s19, 1
      %p58 = scmp.ne.s32.totalorder %s53, %s55
      %p59 = scmp.eq.s32.totalorder %s19, 0
      %p60 = por %p58, %p59
      %p61 = scmp.ne.s32.totalorder %s53, %s55
      %p62 = scmp.eq.s32.totalorder %s24, 1
      %p63 = por %p61, %p62
      %p64 = scmp.ne.s32.totalorder %s55, %s56
      %p65 = scmp.eq.s32.totalorder %s24, 0
      %p66 = por %p64, %p65
      %p67 = scmp.ne.s32.totalorder %s55, %s56
      %p68 = scmp.eq.s32.totalorder %s25, 1
      %p69 = por %p67, %p68
      %p71 = scmp.ne.s32.totalorder %s56, %s70
      %p72 = scmp.eq.s32.totalorder %s25, 0
      %p73 = por %p71, %p72
      %s75 = sadd.s32 %s74, 1
      %p78 = scmp.eq.s32.totalorder %s19, 1
      %p79 = scmp.ne.s32.totalorder %s74, %s76
      %p80 = scmp.eq.s32.totalorder %s19, 0
      %p81 = por %p79, %p80
      %p82 = scmp.ne.s32.totalorder %s74, %s76
      %p83 = scmp.eq.s32.totalorder %s24, 1
      %p84 = por %p82, %p83
      %p85 = scmp.ne.s32.totalorder %s76, %s77
      %p86 = scmp.eq.s32.totalorder %s24, 0
      %p87 = por %p85, %p86
      %p88 = scmp.ne.s32.totalorder %s76, %s77
      %p89 = scmp.eq.s32.totalorder %s25, 1
      %p90 = por %p88, %p89
      %p92 = scmp.ne.s32.totalorder %s77, %s91
      %p93 = scmp.eq.s32.totalorder %s25, 0
      %p94 = por %p92, %p93
      %s96 = sadd.s32 %s95, 1
      %p99 = scmp.eq.s32.totalorder %s19, 1
      %p100 = scmp.ne.s32.totalorder %s95, %s97
      %p101 = scmp.eq.s32.totalorder %s19, 0
      %p102 = por %p100, %p101
      %p103 = scmp.ne.s32.totalorder %s95, %s97
      %p104 = scmp.eq.s32.totalorder %s24, 1
      %p105 = por %p103, %p104
      %p106 = scmp.ne.s32.totalorder %s97, %s98
      %p107 = scmp.eq.s32.totalorder %s24, 0
      %p108 = por %p106, %p107
      %p109 = scmp.ne.s32.totalorder %s97, %s98
      %p110 = scmp.eq.s32.totalorder %s25, 1
      %p111 = por %p109, %p110
      %p113 = scmp.ne.s32.totalorder %s98, %s112
      %p114 = scmp.eq.s32.totalorder %s25, 0
      %p115 = por %p113, %p114
      %s117 = sadd.s32 %s116, 1
      %p120 = scmp.eq.s32.totalorder %s19, 1
      %p121 = scmp.ne.s32.totalorder %s116, %s118
      %p122 = scmp.eq.s32.totalorder %s19, 0
      %p123 = por %p121, %p122
      %p124 = scmp.ne.s32.totalorder %s116, %s118
      %p125 = scmp.eq.s32.totalorder %s24, 1
      %p126 = por %p124, %p125
      %p127 = scmp.ne.s32.totalorder %s118, %s119
      %p128 = scmp.eq.s32.totalorder %s24, 0
      %p129 = por %p127, %p128
      %p130 = scmp.ne.s32.totalorder %s118, %s119
      %p131 = scmp.eq.s32.totalorder %s25, 1
      %p132 = por %p130, %p131
      %p134 = scmp.ne.s32.totalorder %s119, %s133
      %p135 = scmp.eq.s32.totalorder %s25, 0
      %p136 = por %p134, %p135
      %s138 = sadd.s32 %s137, 1
      %p141 = scmp.eq.s32.totalorder %s19, 1
      %p142 = scmp.ne.s32.totalorder %s137, %s139
      %p143 = scmp.eq.s32.totalorder %s19, 0
      %p144 = por %p142, %p143
      %p145 = scmp.ne.s32.totalorder %s137, %s139
      %p146 = scmp.eq.s32.totalorder %s24, 1
      %p147 = por %p145, %p146
      %p148 = scmp.ne.s32.totalorder %s139, %s140
      %p149 = scmp.eq.s32.totalorder %s24, 0
      %p150 = por %p148, %p149
      %p151 = scmp.ne.s32.totalorder %s139, %s140
      %p152 = scmp.eq.s32.totalorder %s25, 1
      %p153 = por %p151, %p152
      %p155 = scmp.ne.s32.totalorder %s140, %s154
      %p156 = scmp.eq.s32.totalorder %s25, 0
      %p157 = por %p155, %p156
      %s159 = sadd.s32 %s158, 1
      %p162 = scmp.eq.s32.totalorder %s19, 1
      %p163 = scmp.ne.s32.totalorder %s158, %s160
      %p164 = scmp.eq.s32.totalorder %s19, 0
      %p165 = por %p163, %p164
      %p166 = scmp.ne.s32.totalorder %s158, %s160
      %p167 = scmp.eq.s32.totalorder %s24, 1
      %p168 = por %p166, %p167
      %p169 = scmp.ne.s32.totalorder %s160, %s161
      %p170 = scmp.eq.s32.totalorder %s24, 0
      %p171 = por %p169, %p170
      %p172 = scmp.ne.s32.totalorder %s160, %s161
      %p173 = scmp.eq.s32.totalorder %s25, 1
      %p174 = por %p172, %p173
      %p176 = scmp.ne.s32.totalorder %s161, %s175
      %p177 = scmp.eq.s32.totalorder %s25, 0
      %p178 = por %p176, %p177
      %s180 = sadd.s32 %s179, 1
      %p183 = scmp.eq.s32.totalorder %s19, 1
      %p184 = scmp.ne.s32.totalorder %s179, %s181
      %p185 = scmp.eq.s32.totalorder %s19, 0
      %p186 = por %p184, %p185
      %p187 = scmp.ne.s32.totalorder %s179, %s181
      %p188 = scmp.eq.s32.totalorder %s24, 1
      %p189 = por %p187, %p188
      %p190 = scmp.ne.s32.totalorder %s181, %s182
      %p191 = scmp.eq.s32.totalorder %s24, 0
      %p192 = por %p190, %p191
      %p193 = scmp.ne.s32.totalorder %s181, %s182
      %p194 = scmp.eq.s32.totalorder %s25, 1
      %p195 = por %p193, %p194
      %p197 = scmp.ne.s32.totalorder %s182, %s196
      %p198 = scmp.eq.s32.totalorder %s25, 0
      %p199 = por %p197, %p198
      %s201 = sadd.s32 %s200, 1
      %p204 = scmp.eq.s32.totalorder %s19, 1
      %p205 = scmp.ne.s32.totalorder %s200, %s202
      %p206 = scmp.eq.s32.totalorder %s19, 0
      %p207 = por %p205, %p206
      %p208 = scmp.ne.s32.totalorder %s200, %s202
      %p209 = scmp.eq.s32.totalorder %s24, 1
      %p210 = por %p208, %p209
      %p211 = scmp.ne.s32.totalorder %s202, %s203
      %p212 = scmp.eq.s32.totalorder %s24, 0
      %p213 = por %p211, %p212
      %p214 = scmp.ne.s32.totalorder %s202, %s203
      %p215 = scmp.eq.s32.totalorder %s25, 1
      %p216 = por %p214, %p215
      %p218 = scmp.ne.s32.totalorder %s203, %s217
      %p219 = scmp.eq.s32.totalorder %s25, 0
      %p220 = por %p218, %p219
      %s222 = sadd.s32 %s221, 1
      %p225 = scmp.eq.s32.totalorder %s19, 1
      %p226 = scmp.ne.s32.totalorder %s221, %s223
      %p227 = scmp.eq.s32.totalorder %s19, 0
      %p228 = por %p226, %p227
      %p229 = scmp.ne.s32.totalorder %s221, %s223
      %p230 = scmp.eq.s32.totalorder %s24, 1
      %p231 = por %p229, %p230
      %p232 = scmp.ne.s32.totalorder %s223, %s224
      %p233 = scmp.eq.s32.totalorder %s24, 0
      %p234 = por %p232, %p233
      %p235 = scmp.ne.s32.totalorder %s223, %s224
      %p236 = scmp.eq.s32.totalorder %s25, 1
      %p237 = por %p235, %p236
      %p239 = scmp.ne.s32.totalorder %s224, %s238
      %p240 = scmp.eq.s32.totalorder %s25, 0
      %p241 = por %p239, %p240
      %s242 = ssub.s32 %s19, %s26
      %p243 = scmp.eq.s32.totalorder %s242, 0
      %s245 = sadd.s32 %s244, 1
      %s246 = scalar_select %p243, %s244, %s245
      %p249 = pneg %p243
      %p250 = scmp.eq.s32.totalorder %s19, 1
      %p251 = por %p249, %p250
      %p252 = scmp.ne.s32.totalorder %s244, %s247
      %p253 = scmp.eq.s32.totalorder %s19, 0
      %p254 = por %p252, %p253
      %p255 = scmp.ne.s32.totalorder %s244, %s247
      %p256 = scmp.eq.s32.totalorder %s24, 1
      %p257 = por %p255, %p256
      %p258 = scmp.ne.s32.totalorder %s247, %s248
      %p259 = scmp.eq.s32.totalorder %s24, 0
      %p260 = por %p258, %p259
      %p261 = scmp.ne.s32.totalorder %s247, %s248
      %p262 = scmp.eq.s32.totalorder %s25, 1
      %p263 = por %p261, %p262
      %p265 = scmp.ne.s32.totalorder %s248, %s264
      %p266 = scmp.eq.s32.totalorder %s25, 0
      %p267 = por %p265, %p266
      %p268 = scmp.le.s32.totalorder 1, %s19
      %p269 = scmp.lt.s32.totalorder %s19, 3
      %p270 = pnand %p268, %p269
      %p271 = pneg %p270
      // Predicated region
      $region9: #{gcn_forward.1} parent=5 // pred_check
        _
      $region10: #{gcn_forward.1} parent=5 // pred_check_branch
        %273 = sbr.rel (%p270) target = $region12
      $region11: #{gcn_forward.1} parent=5 // pred_region
        %s274 = ssub.s32 %s19, 1
        // Predicated region
        $region13: #{gcn_forward.1} parent=11 // pred_check
          %p275 = pneg %p66
        $region14: #{gcn_forward.1} parent=11 // pred_check_branch
          %277 = sbr.rel (%p275) target = $region16
        $region15: #{gcn_forward.1} parent=11 // pred_region
          _
        $region16: #{gcn_forward.1} parent=11 // pred_fallthru
          _
        // Predicated region
        $region17: #{gcn_forward.1} parent=11 // pred_check
          %p278 = pneg %p87
        $region18: #{gcn_forward.1} parent=11 // pred_check_branch
          %280 = sbr.rel (%p278) target = $region20
        $region19: #{gcn_forward.1} parent=11 // pred_region
          _
        $region20: #{gcn_forward.1} parent=11 // pred_fallthru
          _
        // Predicated region
        $region21: #{gcn_forward.1} parent=11 // pred_check
          %p281 = pneg %p108
        $region22: #{gcn_forward.1} parent=11 // pred_check_branch
          %283 = sbr.rel (%p281) target = $region24
        $region23: #{gcn_forward.1} parent=11 // pred_region
          _
        $region24: #{gcn_forward.1} parent=11 // pred_fallthru
          _
        // Predicated region
        $region25: #{gcn_forward.1} parent=11 // pred_check
          %p284 = pneg %p129
        $region26: #{gcn_forward.1} parent=11 // pred_check_branch
          %286 = sbr.rel (%p284) target = $region28
        $region27: #{gcn_forward.1} parent=11 // pred_region
          _
        $region28: #{gcn_forward.1} parent=11 // pred_fallthru
          _
        // Predicated region
        $region29: #{gcn_forward.1} parent=11 // pred_check
          %p287 = pneg %p150
        $region30: #{gcn_forward.1} parent=11 // pred_check_branch
          %289 = sbr.rel (%p287) target = $region32
        $region31: #{gcn_forward.1} parent=11 // pred_region
          _
        $region32: #{gcn_forward.1} parent=11 // pred_fallthru
          _
        // Predicated region
        $region33: #{gcn_forward.1} parent=11 // pred_check
          %p290 = pneg %p171
        $region34: #{gcn_forward.1} parent=11 // pred_check_branch
          %292 = sbr.rel (%p290) target = $region36
        $region35: #{gcn_forward.1} parent=11 // pred_region
          _
        $region36: #{gcn_forward.1} parent=11 // pred_fallthru
          _
        // Predicated region
        $region37: #{gcn_forward.1} parent=11 // pred_check
          %p293 = pneg %p192
        $region38: #{gcn_forward.1} parent=11 // pred_check_branch
          %295 = sbr.rel (%p293) target = $region40
        $region39: #{gcn_forward.1} parent=11 // pred_region
          _
        $region40: #{gcn_forward.1} parent=11 // pred_fallthru
          _
        // Predicated region
        $region41: #{gcn_forward.1} parent=11 // pred_check
          %p296 = pneg %p213
        $region42: #{gcn_forward.1} parent=11 // pred_check_branch
          %298 = sbr.rel (%p296) target = $region44
        $region43: #{gcn_forward.1} parent=11 // pred_region
          _
        $region44: #{gcn_forward.1} parent=11 // pred_fallthru
          _
        // Predicated region
        $region45: #{gcn_forward.1} parent=11 // pred_check
          %p299 = pneg %p234
        $region46: #{gcn_forward.1} parent=11 // pred_check_branch
          %301 = sbr.rel (%p299) target = $region48
        $region47: #{gcn_forward.1} parent=11 // pred_region
          _
        $region48: #{gcn_forward.1} parent=11 // pred_fallthru
          _
      $region12: #{gcn_forward.1} parent=5 // pred_fallthru
        _
      %p302 = scmp.lt.s32.totalorder %s19, 2
      // Predicated region
      $region49: #{gcn_forward.1} parent=5 // pred_check
        %p303 = pneg %p302
      $region50: #{gcn_forward.1} parent=5 // pred_check_branch
        %305 = sbr.rel (%p303) target = $region52
      $region51: #{gcn_forward.1} parent=5 // pred_region
        // Predicated region
        $region53: #{gcn_forward.1} parent=51 // pred_check
          %p306 = pneg %p39
        $region54: #{gcn_forward.1} parent=51 // pred_check_branch
          %308 = sbr.rel (%p306) target = $region56
        $region55: #{gcn_forward.1} parent=51 // pred_region
          %p309 = scmp.lt.s32.totalorder %s19, 1
          %s310 = scalar_select %p309, %s19, 1
          %s311 = smul.addr %s310, 2
          %s312 = smul.addr %s311, 4
          %s313 = scalar_lea.vmem %s0, %s312
        $region56: #{gcn_forward.1} parent=51 // pred_fallthru
          _
      $region52: #{gcn_forward.1} parent=5 // pred_fallthru
        _
      %p314 = scmp.le.s32.totalorder 1, %s19
      %p315 = scmp.lt.s32.totalorder %s19, 3
      %p316 = pnand %p314, %p315
      %p317 = pneg %p316
      // Predicated region
      $region57: #{gcn_forward.1} parent=5 // pred_check
        _
      $region58: #{gcn_forward.1} parent=5 // pred_check_branch
        %319 = sbr.rel (%p316) target = $region60
      $region59: #{gcn_forward.1} parent=5 // pred_region
        %s320 = ssub.s32 %s19, 1
        %p321 = scmp.lt.s32.totalorder %s24, 1
        %s322 = scalar_select %p321, %s24, 1
        %s323 = smul.addr %s322, 2
        %s324 = smul.addr %s323, 4
        %s325 = scalar_lea.vmem %s0, %s324
        %p326 = pneg %p45
        %p327 = pneg %p42
        %p328 = pneg %p66
        %p329 = pneg %p63
        %p330 = pneg %p87
        %p331 = pneg %p84
        %p332 = pneg %p108
        %p333 = pneg %p105
        %p334 = pneg %p129
        %p335 = pneg %p126
        %p336 = pneg %p150
        %p337 = pneg %p147
        %p338 = pneg %p171
        %p339 = pneg %p168
        %p340 = pneg %p192
        %p341 = pneg %p189
        %p342 = pneg %p213
        %p343 = pneg %p210
        %p344 = pneg %p234
        %p345 = pneg %p231
        %p346 = pneg %p260
        %p347 = pneg %p257
        %s348 = sand.u32 %s247, 1
        %s349 = scalar_lea.sflag [#allocation3], %s348
        %s350 = sand.u32 %s247, 1
        %s351 = smul.addr %s350, 32
        %s352 = scalar_lea.vmem [#allocation2], %s351
        %p353 = scmp.lt.s32.totalorder %s24, 1
        %s354 = scalar_select %p353, %s24, 1
        %s355 = smul.addr %s354, 2
        %s356 = smul.addr %s355, 4
        %s357 = scalar_lea.vmem %s0, %s356
        %v359 = vld [vmem:[%s357] sm:$0xf]
        %v360 = vld [vmem:[%s357 + $0x4] sm:$0xf]
        %v361 = vld [vmem:[%s1] sm:$0xf]
        %v362 = vld [vmem:[%s1 + $0x4] sm:$0xf]
        %v363 = vld [vmem:[%s1 + $0x8] sm:$0xf]
        %v364 = vld [vmem:[%s1 + $0xc] sm:$0xf]
        %v365 = vld [vmem:[%s1 + $0x10] sm:$0xf]
        %v366 = vld [vmem:[%s1 + $0x14] sm:$0xf]
        %v367 = vld [vmem:[%s1 + $0x18] sm:$0xf]
        %v368 = vld [vmem:[%s1 + $0x1c] sm:$0xf]
        %v369 = vld [vmem:[%s1 + $0x20] sm:$0xf]
        %v370 = vld [vmem:[%s1 + $0x24] sm:$0xf]
        %v371 = vld [vmem:[%s1 + $0x28] sm:$0xf]
        %v372 = vld [vmem:[%s1 + $0x2c] sm:$0xf]
        %v373 = vld [vmem:[%s1 + $0x30] sm:$0xf]
        %v374 = vld [vmem:[%s1 + $0x34] sm:$0xf]
        %v375 = vld [vmem:[%s1 + $0x38] sm:$0xf]
        %v376 = vld [vmem:[%s1 + $0x3c] sm:$0xf]
        %v377 = vld [vmem:[%s2] sm:$0xf]
        %v378 = vld [vmem:[%s2 + $0x4] sm:$0xf]
        %v379 = vld [vmem:[%s2 + $0x8] sm:$0xf]
        %v380 = vld [vmem:[%s2 + $0xc] sm:$0xf]
        %v381 = vld [vmem:[%s3] sm:$0xff]
        %v382 = vld [vmem:[%s3 + $0x8] sm:$0xff]
        %v383 = vld [vmem:[%s3 + $0x10] sm:$0xff]
        %v384 = vld [vmem:[%s3 + $0x18] sm:$0xff]
        %386 = vset.pattern.permute.xlu0 0
        %387 = vperm.xlu0 %386, %v381
        %v388 = vpop.permute.xlu0 %387
        %391 = vset.pattern.permute.xlu0 0
        %392 = vperm.xlu0 %391, %v382
        %v393 = vpop.permute.xlu0 %392
        %396 = vset.pattern.permute.xlu0 0
        %397 = vperm.xlu0 %396, %v383
        %v398 = vpop.permute.xlu0 %397
        %401 = vset.pattern.permute.xlu0 0
        %402 = vperm.xlu0 %401, %v384
        %v403 = vpop.permute.xlu0 %402
        %v409 = vunpack.c.l.b16 %v377
        %v410 = vunpack.c.l.b16 %v378
        %v411 = vunpack.c.l.b16 %v379
        %v412 = vunpack.c.l.b16 %v380
        %v413 = vpack.c.b16 %v410, %v409
        %v414 = vpack.c.b16 %v412, %v411
        %v417 = vunpack.c.l.b16 %v359
        %v418 = vunpack.c.l.b16 %v360
        %v419 = vpack.c.b16 %v418, %v417
        %vm421 = vcmask 130048
        %v423 = vsel %vm421, %v413, 0
        %v426 = vsel %vm421, %v414, 0
        %428 = vmatpush.bf16.msra.mxu0 0
        %429 = vmatpush.bf16.msra.mxu0 0
        %430 = vmatpush.bf16.msra.mxu0 0
        %431 = vmatpush.bf16.msra.mxu0 0
        %432 = vmatpush.bf16.msra.mxu0 0
        %433 = vmatpush.bf16.msra.mxu0 0
        %434 = vmatpush.bf16.msra.mxu0 0
        %435 = vmatpush.bf16.msra.mxu0 %v419
        %436 = vmatmul.bf16.gmra.mxu0 %v423
        %v437 = vpop.f32.mrf.mxu0
        %v438 = vadd.f32 %v388, %v437
        %v439 = vpop.f32.mrf.mxu0
        %v440 = vadd.f32 %v393, %v439
        %441 = vmatmul.bf16.gmra.mxu0 %v426
        %v442 = vpop.f32.mrf.mxu0
        %v443 = vadd.f32 %v398, %v442
        %v444 = vpop.f32.mrf.mxu0
        %v445 = vadd.f32 %v403, %v444
        %446 = vdwg.mxu0
        %v447 = vmul.f32 %v438, 0.2
        %v448 = vmul.f32 %v440, 0.2
        %v449 = vmul.f32 %v443, 0.2
        %v450 = vmul.f32 %v445, 0.2
        %v451 = vmax.f32 %v438, %v447
        %v452 = vmax.f32 %v440, %v448
        %v453 = vmax.f32 %v443, %v449
        %v454 = vmax.f32 %v445, %v450
        %v455 = vpack.c.bf16 %v452, %v451
        %v456 = vpack.c.bf16 %v454, %v453
        %v457 = vld [vmem:[%s4] sm:$0xf]
        %v458 = vld [vmem:[%s4 + $0x4] sm:$0xf]
        %v459 = vld [vmem:[%s4 + $0x8] sm:$0xf]
        %v460 = vld [vmem:[%s4 + $0xc] sm:$0xf]
        %v461 = vld [vmem:[%s5] sm:$0xff]
        %v462 = vld [vmem:[%s5 + $0x8] sm:$0xff]
        %v463 = vld [vmem:[%s5 + $0x10] sm:$0xff]
        %v464 = vld [vmem:[%s5 + $0x18] sm:$0xff]
        %466 = vset.pattern.permute.xlu0 0
        %467 = vperm.xlu0 %466, %v461
        %v468 = vpop.permute.xlu0 %467
        %471 = vset.pattern.permute.xlu0 0
        %472 = vperm.xlu0 %471, %v462
        %v473 = vpop.permute.xlu0 %472
        %476 = vset.pattern.permute.xlu0 0
        %477 = vperm.xlu0 %476, %v463
        %v478 = vpop.permute.xlu0 %477
        %481 = vset.pattern.permute.xlu0 0
        %482 = vperm.xlu0 %481, %v464
        %v483 = vpop.permute.xlu0 %482
        %v489 = vunpack.c.l.b16 %v457
        %v490 = vunpack.c.l.b16 %v458
        %v491 = vunpack.c.l.b16 %v459
        %v492 = vunpack.c.l.b16 %v460
        %v493 = vpack.c.b16 %v490, %v489
        %v494 = vpack.c.b16 %v492, %v491
        %vm495 = vcmask 261120
        %v497 = vsel %vm495, %v493, 0
        %v500 = vsel %vm495, %v494, 0
        %502 = vmatpush.bf16.msra.mxu0 0
        %503 = vmatpush.bf16.msra.mxu0 0
        %504 = vmatpush.bf16.msra.mxu0 0
        %505 = vmatpush.bf16.msra.mxu0 0
        %506 = vmatpush.bf16.msra.mxu0 0
        %507 = vmatpush.bf16.msra.mxu0 0
        %508 = vmatpush.bf16.msra.mxu0 %v456
        %509 = vmatpush.bf16.msra.mxu0 %v455
        %510 = vmatmul.bf16.gmra.mxu0 %v497
        %v511 = vpop.f32.mrf.mxu0
        %v512 = vadd.f32 %v468, %v511
        %v513 = vpop.f32.mrf.mxu0
        %v514 = vadd.f32 %v473, %v513
        %515 = vmatmul.bf16.gmra.mxu0 %v500
        %v516 = vpop.f32.mrf.mxu0
        %v517 = vadd.f32 %v478, %v516
        %v518 = vpop.f32.mrf.mxu0
        %v519 = vadd.f32 %v483, %v518
        %520 = vdwg.mxu0
        %v521 = vmul.f32 %v512, 0.2
        %v522 = vmul.f32 %v514, 0.2
        %v523 = vmul.f32 %v517, 0.2
        %v524 = vmul.f32 %v519, 0.2
        %v525 = vmax.f32 %v512, %v521
        %v526 = vmax.f32 %v514, %v522
        %v527 = vmax.f32 %v517, %v523
        %v528 = vmax.f32 %v519, %v524
        %v529 = vpack.c.bf16 %v526, %v525
        %v530 = vpack.c.bf16 %v528, %v527
        %v531 = vld [vmem:[%s6] sm:$0xf]
        %v532 = vld [vmem:[%s6 + $0x4] sm:$0xf]
        %v533 = vld [vmem:[%s6 + $0x8] sm:$0xf]
        %v534 = vld [vmem:[%s6 + $0xc] sm:$0xf]
        %v535 = vld [vmem:[%s7] sm:$0xff]
        %v536 = vld [vmem:[%s7 + $0x8] sm:$0xff]
        %v537 = vld [vmem:[%s7 + $0x10] sm:$0xff]
        %v538 = vld [vmem:[%s7 + $0x18] sm:$0xff]
        %540 = vset.pattern.permute.xlu0 0
        %541 = vperm.xlu0 %540, %v535
        %v542 = vpop.permute.xlu0 %541
        %545 = vset.pattern.permute.xlu0 0
        %546 = vperm.xlu0 %545, %v536
        %v547 = vpop.permute.xlu0 %546
        %550 = vset.pattern.permute.xlu0 0
        %551 = vperm.xlu0 %550, %v537
        %v552 = vpop.permute.xlu0 %551
        %555 = vset.pattern.permute.xlu0 0
        %556 = vperm.xlu0 %555, %v538
        %v557 = vpop.permute.xlu0 %556
        %v563 = vunpack.c.l.b16 %v531
        %v564 = vunpack.c.l.b16 %v532
        %v565 = vunpack.c.l.b16 %v533
        %v566 = vunpack.c.l.b16 %v534
        %v567 = vpack.c.b16 %v564, %v563
        %v568 = vpack.c.b16 %v566, %v565
        %v570 = vsel %vm495, %v567, 0
        %v573 = vsel %vm495, %v568, 0
        %575 = vmatpush.bf16.msra.mxu0 0
        %576 = vmatpush.bf16.msra.mxu0 0
        %577 = vmatpush.bf16.msra.mxu0 0
        %578 = vmatpush.bf16.msra.mxu0 0
        %579 = vmatpush.bf16.msra.mxu0 0
        %580 = vmatpush.bf16.msra.mxu0 0
        %581 = vmatpush.bf16.msra.mxu0 %v530
        %582 = vmatpush.bf16.msra.mxu0 %v529
        %583 = vmatmul.bf16.gmra.mxu0 %v570
        %v584 = vpop.f32.mrf.mxu0
        %v585 = vadd.f32 %v542, %v584
        %v586 = vpop.f32.mrf.mxu0
        %v587 = vadd.f32 %v547, %v586
        %588 = vmatmul.bf16.gmra.mxu0 %v573
        %v589 = vpop.f32.mrf.mxu0
        %v590 = vadd.f32 %v552, %v589
        %v591 = vpop.f32.mrf.mxu0
        %v592 = vadd.f32 %v557, %v591
        %593 = vdwg.mxu0
        %v594 = vpack.c.bf16 %v587, %v585
        %v595 = vpack.c.bf16 %v592, %v590
        %v612 = vunpack.c.l.b16 %v361
        %v613 = vunpack.c.l.b16 %v362
        %v614 = vunpack.c.l.b16 %v363
        %v615 = vunpack.c.l.b16 %v364
        %v616 = vunpack.c.l.b16 %v365
        %v617 = vunpack.c.l.b16 %v366
        %v618 = vunpack.c.l.b16 %v367
        %v619 = vunpack.c.l.b16 %v368
        %v620 = vunpack.c.l.b16 %v369
        %v621 = vunpack.c.l.b16 %v370
        %v622 = vunpack.c.l.b16 %v371
        %v623 = vunpack.c.l.b16 %v372
        %v624 = vunpack.c.l.b16 %v373
        %v625 = vunpack.c.l.b16 %v374
        %v626 = vunpack.c.l.b16 %v375
        %v627 = vunpack.c.l.b16 %v376
        %v628 = vpack.c.b16 %v613, %v612
        %v629 = vpack.c.b16 %v615, %v614
        %v630 = vpack.c.b16 %v617, %v616
        %v631 = vpack.c.b16 %v619, %v618
        %v632 = vpack.c.b16 %v621, %v620
        %v633 = vpack.c.b16 %v623, %v622
        %v634 = vpack.c.b16 %v625, %v624
        %v635 = vpack.c.b16 %v627, %v626
        %644 = vmatpush.bf16.msra.mxu0 %v635
        %645 = vmatpush.bf16.msra.mxu0 %v634
        %646 = vmatpush.bf16.msra.mxu0 %v633
        %647 = vmatpush.bf16.msra.mxu0 %v632
        %648 = vmatpush.bf16.msra.mxu0 %v631
        %649 = vmatpush.bf16.msra.mxu0 %v630
        %650 = vmatpush.bf16.msra.mxu0 %v629
        %651 = vmatpush.bf16.msra.mxu0 %v628
        %652 = vmatmul.bf16.gmra.mxu0 %v594
        %v653 = vpop.f32.mrf.mxu0
        %v654 = vadd.f32 0.0, %v653
        %v655 = vpop.f32.mrf.mxu0
        %v656 = vadd.f32 0.0, %v655
        %657 = vmatmul.bf16.gmra.mxu0 %v595
        %v658 = vpop.f32.mrf.mxu0
        %v659 = vadd.f32 0.0, %v658
        %v660 = vpop.f32.mrf.mxu0
        %v661 = vadd.f32 0.0, %v660
        %662 = vdwg.mxu0
        %v663 = vpack.c.bf16 %v656, %v654
        %v664 = vpack.c.bf16 %v661, %v659
        %s665 = scalar_lea.vmem %s4, 16
        %v666 = vld [vmem:[%s665] sm:$0xf]
        %v667 = vld [vmem:[%s665 + $0x4] sm:$0xf]
        %v668 = vld [vmem:[%s665 + $0x8] sm:$0xf]
        %v669 = vld [vmem:[%s665 + $0xc] sm:$0xf]
        %s670 = scalar_lea.vmem %s5, 32
        %v671 = vld [vmem:[%s670] sm:$0xff]
        %v672 = vld [vmem:[%s670 + $0x8] sm:$0xff]
        %v673 = vld [vmem:[%s670 + $0x10] sm:$0xff]
        %v674 = vld [vmem:[%s670 + $0x18] sm:$0xff]
        %676 = vset.pattern.permute.xlu0 0
        %677 = vperm.xlu0 %676, %v671
        %v678 = vpop.permute.xlu0 %677
        %681 = vset.pattern.permute.xlu0 0
        %682 = vperm.xlu0 %681, %v672
        %v683 = vpop.permute.xlu0 %682
        %686 = vset.pattern.permute.xlu0 0
        %687 = vperm.xlu0 %686, %v673
        %v688 = vpop.permute.xlu0 %687
        %691 = vset.pattern.permute.xlu0 0
        %692 = vperm.xlu0 %691, %v674
        %v693 = vpop.permute.xlu0 %692
        %v699 = vunpack.c.l.b16 %v666
        %v700 = vunpack.c.l.b16 %v667
        %v701 = vunpack.c.l.b16 %v668
        %v702 = vunpack.c.l.b16 %v669
        %v703 = vpack.c.b16 %v700, %v699
        %v704 = vpack.c.b16 %v702, %v701
        %v706 = vsel %vm495, %v703, 0
        %v709 = vsel %vm495, %v704, 0
        %711 = vmatpush.bf16.msra.mxu0 0
        %712 = vmatpush.bf16.msra.mxu0 0
        %713 = vmatpush.bf16.msra.mxu0 0
        %714 = vmatpush.bf16.msra.mxu0 0
        %715 = vmatpush.bf16.msra.mxu0 0
        %716 = vmatpush.bf16.msra.mxu0 0
        %717 = vmatpush.bf16.msra.mxu0 %v664
        %718 = vmatpush.bf16.msra.mxu0 %v663
        %719 = vmatmul.bf16.gmra.mxu0 %v706
        %v720 = vpop.f32.mrf.mxu0
        %v721 = vadd.f32 %v678, %v720
        %v722 = vpop.f32.mrf.mxu0
        %v723 = vadd.f32 %v683, %v722
        %724 = vmatmul.bf16.gmra.mxu0 %v709
        %v725 = vpop.f32.mrf.mxu0
        %v726 = vadd.f32 %v688, %v725
        %v727 = vpop.f32.mrf.mxu0
        %v728 = vadd.f32 %v693, %v727
        %729 = vdwg.mxu0
        %v730 = vmul.f32 %v721, 0.2
        %v731 = vmul.f32 %v723, 0.2
        %v732 = vmul.f32 %v726, 0.2
        %v733 = vmul.f32 %v728, 0.2
        %v734 = vmax.f32 %v721, %v730
        %v735 = vmax.f32 %v723, %v731
        %v736 = vmax.f32 %v726, %v732
        %v737 = vmax.f32 %v728, %v733
        %v738 = vpack.c.bf16 %v735, %v734
        %v739 = vpack.c.bf16 %v737, %v736
        %s740 = scalar_lea.vmem %s6, 16
        %v741 = vld [vmem:[%s740] sm:$0xf]
        %v742 = vld [vmem:[%s740 + $0x4] sm:$0xf]
        %v743 = vld [vmem:[%s740 + $0x8] sm:$0xf]
        %v744 = vld [vmem:[%s740 + $0xc] sm:$0xf]
        %s745 = scalar_lea.vmem %s7, 32
        %v746 = vld [vmem:[%s745] sm:$0xff]
        %v747 = vld [vmem:[%s745 + $0x8] sm:$0xff]
        %v748 = vld [vmem:[%s745 + $0x10] sm:$0xff]
        %v749 = vld [vmem:[%s745 + $0x18] sm:$0xff]
        %751 = vset.pattern.permute.xlu0 0
        %752 = vperm.xlu0 %751, %v746
        %v753 = vpop.permute.xlu0 %752
        %756 = vset.pattern.permute.xlu0 0
        %757 = vperm.xlu0 %756, %v747
        %v758 = vpop.permute.xlu0 %757
        %761 = vset.pattern.permute.xlu0 0
        %762 = vperm.xlu0 %761, %v748
        %v763 = vpop.permute.xlu0 %762
        %766 = vset.pattern.permute.xlu0 0
        %767 = vperm.xlu0 %766, %v749
        %v768 = vpop.permute.xlu0 %767
        %v774 = vunpack.c.l.b16 %v741
        %v775 = vunpack.c.l.b16 %v742
        %v776 = vunpack.c.l.b16 %v743
        %v777 = vunpack.c.l.b16 %v744
        %v778 = vpack.c.b16 %v775, %v774
        %v779 = vpack.c.b16 %v777, %v776
        %v781 = vsel %vm495, %v778, 0
        %v784 = vsel %vm495, %v779, 0
        %786 = vmatpush.bf16.msra.mxu0 0
        %787 = vmatpush.bf16.msra.mxu0 0
        %788 = vmatpush.bf16.msra.mxu0 0
        %789 = vmatpush.bf16.msra.mxu0 0
        %790 = vmatpush.bf16.msra.mxu0 0
        %791 = vmatpush.bf16.msra.mxu0 0
        %792 = vmatpush.bf16.msra.mxu0 %v739
        %793 = vmatpush.bf16.msra.mxu0 %v738
        %794 = vmatmul.bf16.gmra.mxu0 %v781
        %v795 = vpop.f32.mrf.mxu0
        %v796 = vadd.f32 %v753, %v795
        %v797 = vpop.f32.mrf.mxu0
        %v798 = vadd.f32 %v758, %v797
        %799 = vmatmul.bf16.gmra.mxu0 %v784
        %v800 = vpop.f32.mrf.mxu0
        %v801 = vadd.f32 %v763, %v800
        %v802 = vpop.f32.mrf.mxu0
        %v803 = vadd.f32 %v768, %v802
        %804 = vdwg.mxu0
        %v805 = vpack.c.bf16 %v798, %v796
        %v806 = vpack.c.bf16 %v803, %v801
        %807 = vmatpush.bf16.msra.mxu0 %v635
        %808 = vmatpush.bf16.msra.mxu0 %v634
        %809 = vmatpush.bf16.msra.mxu0 %v633
        %810 = vmatpush.bf16.msra.mxu0 %v632
        %811 = vmatpush.bf16.msra.mxu0 %v631
        %812 = vmatpush.bf16.msra.mxu0 %v630
        %813 = vmatpush.bf16.msra.mxu0 %v629
        %814 = vmatpush.bf16.msra.mxu0 %v628
        %815 = vmatmul.bf16.gmra.mxu0 %v805
        %v816 = vpop.f32.mrf.mxu0
        %v817 = vadd.f32 0.0, %v816
        %v818 = vpop.f32.mrf.mxu0
        %v819 = vadd.f32 0.0, %v818
        %820 = vmatmul.bf16.gmra.mxu0 %v806
        %v821 = vpop.f32.mrf.mxu0
        %v822 = vadd.f32 0.0, %v821
        %v823 = vpop.f32.mrf.mxu0
        %v824 = vadd.f32 0.0, %v823
        %825 = vdwg.mxu0
        %v826 = vpack.c.bf16 %v819, %v817
        %v827 = vpack.c.bf16 %v824, %v822
        %v828 = vld [vmem:[%s8] sm:$0xf]
        %v829 = vld [vmem:[%s8 + $0x4] sm:$0xf]
        %v830 = vld [vmem:[%s8 + $0x8] sm:$0xf]
        %v831 = vld [vmem:[%s8 + $0xc] sm:$0xf]
        %v832 = vld [vmem:[%s9] sm:$0xff]
        %v833 = vld [vmem:[%s9 + $0x8] sm:$0xff]
        %v834 = vld [vmem:[%s9 + $0x10] sm:$0xff]
        %v835 = vld [vmem:[%s9 + $0x18] sm:$0xff]
        %837 = vset.pattern.permute.xlu0 0
        %838 = vperm.xlu0 %837, %v832
        %v839 = vpop.permute.xlu0 %838
        %842 = vset.pattern.permute.xlu0 0
        %843 = vperm.xlu0 %842, %v833
        %v844 = vpop.permute.xlu0 %843
        %847 = vset.pattern.permute.xlu0 0
        %848 = vperm.xlu0 %847, %v834
        %v849 = vpop.permute.xlu0 %848
        %852 = vset.pattern.permute.xlu0 0
        %853 = vperm.xlu0 %852, %v835
        %v854 = vpop.permute.xlu0 %853
        %v860 = vunpack.c.l.b16 %v828
        %v861 = vunpack.c.l.b16 %v829
        %v862 = vunpack.c.l.b16 %v830
        %v863 = vunpack.c.l.b16 %v831
        %v864 = vpack.c.b16 %v861, %v860
        %v865 = vpack.c.b16 %v863, %v862
        %v867 = vsel %vm495, %v864, 0
        %v870 = vsel %vm495, %v865, 0
        %872 = vmatpush.bf16.msra.mxu0 0
        %873 = vmatpush.bf16.msra.mxu0 0
        %874 = vmatpush.bf16.msra.mxu0 0
        %875 = vmatpush.bf16.msra.mxu0 0
        %876 = vmatpush.bf16.msra.mxu0 0
        %877 = vmatpush.bf16.msra.mxu0 0
        %878 = vmatpush.bf16.msra.mxu0 %v827
        %879 = vmatpush.bf16.msra.mxu0 %v826
        %880 = vmatmul.bf16.gmra.mxu0 %v867
        %v881 = vpop.f32.mrf.mxu0
        %v882 = vadd.f32 %v839, %v881
        %v883 = vpop.f32.mrf.mxu0
        %v884 = vadd.f32 %v844, %v883
        %885 = vmatmul.bf16.gmra.mxu0 %v870
        %v886 = vpop.f32.mrf.mxu0
        %v887 = vadd.f32 %v849, %v886
        %v888 = vpop.f32.mrf.mxu0
        %v889 = vadd.f32 %v854, %v888
        %890 = vdwg.mxu0
        %v891 = vmul.f32 %v882, 0.2
        %v892 = vmul.f32 %v884, 0.2
        %v893 = vmul.f32 %v887, 0.2
        %v894 = vmul.f32 %v889, 0.2
        %v895 = vmax.f32 %v882, %v891
        %v896 = vmax.f32 %v884, %v892
        %v897 = vmax.f32 %v887, %v893
        %v898 = vmax.f32 %v889, %v894
        %v899 = vadd.f32 %v895, %v451
        %v900 = vadd.f32 %v896, %v452
        %v901 = vadd.f32 %v897, %v453
        %v902 = vadd.f32 %v898, %v454
        %903 = vst [vmem:[%s352] sm:$0xff] %v899
        %904 = vst [vmem:[%s352 + $0x8] sm:$0xff] %v900
        %905 = vst [vmem:[%s352 + $0x10] sm:$0xff] %v901
        %906 = vst [vmem:[%s352 + $0x18] sm:$0xff] %v902
        %s907 = sand.u32 %s247, 1
        %s908 = scalar_lea.sflag [#allocation3], %s907
        %s909 = sand.u32 %s247, 1
        %s910 = smul.addr %s909, 32
        %s911 = scalar_lea.vmem [#allocation2], %s910
        // Predicated region
        $region61: #{gcn_forward.1} parent=59 // pred_check
          %p912 = pneg %p257
        $region62: #{gcn_forward.1} parent=59 // pred_check_branch
          %914 = sbr.rel (%p912) target = $region64
        $region63: #{gcn_forward.1} parent=59 // pred_region
          %916 = vsyncadd %s908, 0
          %s917 = smul.addr %s24, 4
          %s918 = smul.addr %s917, 8
          %s919 = scalar_lea.hbm %s10, %s918
          %s920 = sshll.u32 %s911, 4
          %s921 = int_to_ptr.vmem [resolvable:$true] %s920
          %s922 = sshll.u32 %s919, 4
          %s923 = int_to_ptr.hbm [resolvable:$true] %s922
          %928 = dma.vmem_to_hbm [thread:$0]  %s921, 512, %s923, %s908, 128, 128, 8
        $region64: #{gcn_forward.1} parent=59 // pred_fallthru
          _
      $region60: #{gcn_forward.1} parent=5 // pred_fallthru
        _
      %p929 = scmp.le.s32.totalorder 2, %s19
      // Predicated region
      $region65: #{gcn_forward.1} parent=5 // pred_check
        %p930 = pneg %p929
      $region66: #{gcn_forward.1} parent=5 // pred_check_branch
        %932 = sbr.rel (%p930) target = $region68
      $region67: #{gcn_forward.1} parent=5 // pred_region
        %s933 = ssub.s32 %s19, 2
        // Predicated region
        $region69: #{gcn_forward.1} parent=67 // pred_check
          %p934 = pneg %p263
        $region70: #{gcn_forward.1} parent=67 // pred_check_branch
          %936 = sbr.rel (%p934) target = $region72
        $region71: #{gcn_forward.1} parent=67 // pred_region
          %s937 = sand.u32 %s248, 1
          %s938 = scalar_lea.sflag [#allocation3], %s937
          %s939 = sand.u32 %s248, 1
          %s940 = smul.addr %s939, 32
          %s941 = scalar_lea.vmem [#allocation2], %s940
          %943 = dma.done %s938, 512
        $region72: #{gcn_forward.1} parent=67 // pred_fallthru
          _
      $region68: #{gcn_forward.1} parent=5 // pred_fallthru
        _
    $region6: #{gcn_forward.1} parent=1 // loop_footer
      %s23 = sadd.s32 1, %s19
    $region7: #{gcn_forward.1} parent=1 // loop_footer_branch
      %18 = sbr.rel target = $region3
    $region8: #{gcn_forward.1} parent=1 // loop_exit
      _
    %944 = vsyncpa [#allocation3], 1
    %s945 = scalar_lea.sflag [#allocation3], 1
    %946 = vsyncpa %s945, 1

</llo_original>
